<compile_context>
chip_gen: v7x
topology: tpu7x:2x2x1
jax: 0.10.0
libtpu: 0.0.40
codegen_flags: <defaults>
</compile_context>

<pallas_src>
import functools
import math

import jax
import jax.numpy as jnp
from jax import lax
from jax.experimental import pallas as pl
from jax.experimental.pallas import tpu as pltpu

_TWO_PI = 2.0 * math.pi
_INV_2_24 = 1.0 / 16777216.0                      # 2**-24
# 32-bit hash constants expressed as int32 bit patterns (wrap-around arithmetic).
_MUL1 = 0x7FEB352D                                # fits in int32
_MUL2 = 0x846CA68B - (1 << 32)                    # two's-complement view
_SALT = 0x9E3779B9 - (1 << 32)                    # second Box-Muller stream


def _hash32(x):
    """lowbias32-style integer finalizer on int32 bit patterns.

    XOR / logical-shift / wrapping-multiply are bit-identical to the uint32
    version, so hash quality is preserved while staying in well-supported
    signed-int32 ops.
    """
    x = x ^ lax.shift_right_logical(x, jnp.int32(16))
    x = x * jnp.int32(_MUL1)
    x = x ^ lax.shift_right_logical(x, jnp.int32(15))
    x = x * jnp.int32(_MUL2)
    x = x ^ lax.shift_right_logical(x, jnp.int32(16))
    return x


def _pixel_noise_kernel(seed_ref, fm_ref, scale_ref, out_ref, *,
                        hw, tile, paired):
    """One grid step = one (batch, spatial-tile) block.

    seed_ref  : (1,) int32, SMEM (scalar prefetch)
    fm_ref    : (C, tile)   feature block (channels in sublanes, pixels in lanes)
    scale_ref : (C, 1)      noise_factor * style * modulation for this batch
    out_ref   : (C, tile)
    """
    b = pl.program_id(0)
    t = pl.program_id(1)
    c = fm_ref.shape[0]

    # Number of Box-Muller pairs to draw: paired mode emits 2 normals per pair.
    n = tile // 2 if paired else tile

    # Unique 32-bit counter per generated pair/element across the whole tensor,
    # mixed with the runtime seed. All int32, wrap-around is fine for hashing.
    c_idx = lax.broadcasted_iota(jnp.int32, (c, n), 0)
    p_idx = lax.broadcasted_iota(jnp.int32, (c, n), 1)
    base = (b * c + c_idx) * hw + t * tile + p_idx
    mix = base ^ seed_ref[0]

    z1 = _hash32(mix)
    z2 = _hash32(mix ^ jnp.int32(_SALT))

    # Box-Muller: u1 in (0, 1] (log-safe), u2 in [0, 1).
    u1 = (lax.shift_right_logical(z1, jnp.int32(8)).astype(jnp.float32) + 1.0) \
         * _INV_2_24
    u2 = lax.shift_right_logical(z2, jnp.int32(8)).astype(jnp.float32) * _INV_2_24
    r = jnp.sqrt(-2.0 * jnp.log(u1))
    theta = _TWO_PI * u2
    if paired:
        # Use both Box-Muller outputs: halves PRNG draws and log/sqrt per normal.
        randn = jnp.concatenate([r * jnp.cos(theta), r * jnp.sin(theta)], axis=-1)
    else:
        randn = r * jnp.cos(theta)

    # (C, tile) + (C, tile) * (C, 1): sublane-indexed broadcast across lanes.
    out_ref[...] = (fm_ref[...].astype(jnp.float32)
                    + randn * scale_ref[...].astype(jnp.float32)
                    ).astype(out_ref.dtype)


def _choose_hw_tile(hw):
    """Spatial (lane-dim) tile: full plane if small, else a 128-aligned divisor."""
    if hw <= 2048:
        return hw
    for t in (2048, 1024, 512, 256, 128):
        if hw % t == 0:
            return t
    return hw  # odd / unaligned spatial extent: take the full plane


def pixel_noise_injection(feature_map, noise, weight, bias, modulation,
                          noise_factor, seed):
    """feature_map: (B, C, H, W); noise: (B, Nd); weight: (C, Nd) [nn.Linear];
    bias: (C,); modulation: (1, C, 1, 1). Returns (B, C, H, W)."""
    B, C, H, W = feature_map.shape
    HW = H * W

    # NCHW -> (B, C, H*W): pure reshape, no transposes / extra HBM traffic.
    fm = feature_map.reshape(B, C, HW)

    # Hoisted style path: tiny (B, Nd) x (Nd, C) XLA matmul, with modulation and
    # noise_factor folded in once per (batch, channel).
    style = noise.astype(jnp.float32) @ weight.astype(jnp.float32).T \
            + bias.astype(jnp.float32)
    scale = style * modulation.reshape(1, C).astype(jnp.float32) \
            * jnp.float32(noise_factor)
    scale = scale.reshape(B, C, 1)

    tile = _choose_hw_tile(HW)
    n_tiles = HW // tile
    paired = (tile % 256 == 0)      # both Box-Muller branches, lane-aligned halves
    seed_arr = jnp.asarray([seed], dtype=jnp.int32)

    kernel = functools.partial(_pixel_noise_kernel, hw=HW, tile=tile,
                               paired=paired)

    out = pl.pallas_call(
        kernel,
        out_shape=jax.ShapeDtypeStruct((B, C, HW), feature_map.dtype),
        grid_spec=pltpu.PrefetchScalarGridSpec(
            num_scalar_prefetch=1,                         # seed -> SMEM
            grid=(B, n_tiles),
            in_specs=[
                # feature block: batch dim squeezed, kernel sees (C, tile)
                pl.BlockSpec((None, C, tile), lambda b, t, seed: (b, 0, t)),
                # per-batch folded scale: kernel sees (C, 1)
                pl.BlockSpec((None, C, 1), lambda b, t, seed: (b, 0, 0)),
            ],
            out_specs=pl.BlockSpec((None, C, tile), lambda b, t, seed: (b, 0, t)),
        ),
        compiler_params=pltpu.CompilerParams(
            dimension_semantics=("parallel", "parallel"),
            vmem_limit_bytes=48 * 1024 * 1024,
        ),
    )(seed_arr, fm, scale)

    return out.reshape(B, C, H, W)


if __name__ == "__main__":
    B, C, H, W, Nd = 2, 4, 16, 16, 8
    noise_factor = 0.1

    key = jax.random.PRNGKey(0)
    k1, k2, k3, k4 = jax.random.split(key, 4)

    feature_map = jax.random.normal(k1, (B, C, H, W), dtype=jnp.float32)
    noise = jax.random.normal(k2, (B, Nd), dtype=jnp.float32)

    # Deterministic init of nn.Linear(noise_dim, feature_channels) params.
    bound = 1.0 / (Nd ** 0.5)
    weight = jax.random.uniform(k3, (C, Nd), minval=-bound, maxval=bound,
                                dtype=jnp.float32)
    bias = jax.random.uniform(k4, (C,), minval=-bound, maxval=bound,
                              dtype=jnp.float32)
    modulation = jnp.ones((1, C, 1, 1), dtype=jnp.float32)

    out = pixel_noise_injection(feature_map, noise, weight, bias, modulation,
                                noise_factor, seed=42)
    out = jax.block_until_ready(out)

    assert out.shape == feature_map.shape and out.dtype == feature_map.dtype
    assert bool(jnp.all(jnp.isfinite(out)))

    # Sanity: residual / (noise_factor * style * modulation) recovers the
    # in-kernel standard-normal draw exactly (mod float error) -> ~N(0, 1).
    style_ref = noise @ weight.T + bias                           # (B, C)
    scale_ref = noise_factor * style_ref * modulation.reshape(1, C)
    z = (out - feature_map) / scale_ref[:, :, None, None]
    z = z.reshape(-1)
    assert abs(float(jnp.mean(z))) < 0.15, float(jnp.mean(z))
    assert 0.85 < float(jnp.std(z)) < 1.15, float(jnp.std(z))

    print("KERNEL_OK")
</pallas_src>

<mosaic_0001>
module attributes {stable_mosaic.version = 11 : i64} {
  func.func @_pixel_noise_kernel(%arg0: i32, %arg1: i32, %arg2: memref<1xi32, #tpu.memory_space<smem>>, %arg3: memref<1x4x256xf32, #tpu.memory_space<vmem>>, %arg4: memref<1x4x1xf32, #tpu.memory_space<vmem>>, %arg5: memref<1x4x256xf32, #tpu.memory_space<vmem>>) attributes {dimension_semantics = [#tpu.dimension_semantics<parallel>, #tpu.dimension_semantics<parallel>], iteration_bounds = array<i64: 2, 1>, scalar_prefetch = 1 : i64, scratch_operands = 0 : i64, tpu.core_type = #tpu.core_type<tc>, window_params = [{transform_indices = @transform_0, window_bounds = array<i64: 1, 4, 256>}, {transform_indices = @transform_1, window_bounds = array<i64: 1, 4, 1>}, {transform_indices = @transform_2, window_bounds = array<i64: 1, 4, 256>}]} {
    %0 = tpu.iota {dimensions = array<i32: 0>} : vector<4x128xi32>
    %1 = tpu.iota {dimensions = array<i32: 1>} : vector<4x128xi32>
    %c4_i32 = arith.constant 4 : i32
    %2 = arith.muli %arg0, %c4_i32 : i32
    %3 = vector.broadcast %2 : i32 to vector<4x128xi32>
    %4 = arith.addi %3, %0 : vector<4x128xi32>
    %c256_i32 = arith.constant 256 : i32
    %5 = vector.broadcast %c256_i32 : i32 to vector<4x128xi32>
    %6 = arith.muli %4, %5 : vector<4x128xi32>
    %c256_i32_0 = arith.constant 256 : i32
    %7 = arith.muli %arg1, %c256_i32_0 : i32
    %8 = vector.broadcast %7 : i32 to vector<4x128xi32>
    %9 = arith.addi %6, %8 : vector<4x128xi32>
    %10 = arith.addi %9, %1 : vector<4x128xi32>
    %c0 = arith.constant 0 : index
    %11 = memref.load %arg2[%c0] : memref<1xi32, #tpu.memory_space<smem>>
    %12 = vector.broadcast %11 : i32 to vector<4x128xi32>
    %13 = arith.xori %10, %12 : vector<4x128xi32>
    %c16_i32 = arith.constant 16 : i32
    %14 = vector.broadcast %c16_i32 : i32 to vector<4x128xi32>
    %15 = arith.shrui %13, %14 : vector<4x128xi32>
    %16 = arith.xori %13, %15 : vector<4x128xi32>
    %c2146121005_i32 = arith.constant 2146121005 : i32
    %17 = vector.broadcast %c2146121005_i32 : i32 to vector<4x128xi32>
    %18 = arith.muli %16, %17 : vector<4x128xi32>
    %c15_i32 = arith.constant 15 : i32
    %19 = vector.broadcast %c15_i32 : i32 to vector<4x128xi32>
    %20 = arith.shrui %18, %19 : vector<4x128xi32>
    %21 = arith.xori %18, %20 : vector<4x128xi32>
    %c-2073254261_i32 = arith.constant -2073254261 : i32
    %22 = vector.broadcast %c-2073254261_i32 : i32 to vector<4x128xi32>
    %23 = arith.muli %21, %22 : vector<4x128xi32>
    %c16_i32_1 = arith.constant 16 : i32
    %24 = vector.broadcast %c16_i32_1 : i32 to vector<4x128xi32>
    %25 = arith.shrui %23, %24 : vector<4x128xi32>
    %26 = arith.xori %23, %25 : vector<4x128xi32>
    %c-1640531527_i32 = arith.constant -1640531527 : i32
    %27 = vector.broadcast %c-1640531527_i32 : i32 to vector<4x128xi32>
    %28 = arith.xori %13, %27 : vector<4x128xi32>
    %c16_i32_2 = arith.constant 16 : i32
    %29 = vector.broadcast %c16_i32_2 : i32 to vector<4x128xi32>
    %30 = arith.shrui %28, %29 : vector<4x128xi32>
    %31 = arith.xori %28, %30 : vector<4x128xi32>
    %c2146121005_i32_3 = arith.constant 2146121005 : i32
    %32 = vector.broadcast %c2146121005_i32_3 : i32 to vector<4x128xi32>
    %33 = arith.muli %31, %32 : vector<4x128xi32>
    %c15_i32_4 = arith.constant 15 : i32
    %34 = vector.broadcast %c15_i32_4 : i32 to vector<4x128xi32>
    %35 = arith.shrui %33, %34 : vector<4x128xi32>
    %36 = arith.xori %33, %35 : vector<4x128xi32>
    %c-2073254261_i32_5 = arith.constant -2073254261 : i32
    %37 = vector.broadcast %c-2073254261_i32_5 : i32 to vector<4x128xi32>
    %38 = arith.muli %36, %37 : vector<4x128xi32>
    %c16_i32_6 = arith.constant 16 : i32
    %39 = vector.broadcast %c16_i32_6 : i32 to vector<4x128xi32>
    %40 = arith.shrui %38, %39 : vector<4x128xi32>
    %41 = arith.xori %38, %40 : vector<4x128xi32>
    %c8_i32 = arith.constant 8 : i32
    %42 = vector.broadcast %c8_i32 : i32 to vector<4x128xi32>
    %43 = arith.shrui %26, %42 : vector<4x128xi32>
    %44 = arith.sitofp %43 : vector<4x128xi32> to vector<4x128xf32>
    %cst = arith.constant 1.000000e+00 : f32
    %45 = vector.broadcast %cst : f32 to vector<4x128xf32>
    %46 = arith.addf %44, %45 : vector<4x128xf32>
    %cst_7 = arith.constant 5.96046448E-8 : f32
    %47 = vector.broadcast %cst_7 : f32 to vector<4x128xf32>
    %48 = arith.mulf %46, %47 : vector<4x128xf32>
    %c8_i32_8 = arith.constant 8 : i32
    %49 = vector.broadcast %c8_i32_8 : i32 to vector<4x128xi32>
    %50 = arith.shrui %41, %49 : vector<4x128xi32>
    %51 = arith.sitofp %50 : vector<4x128xi32> to vector<4x128xf32>
    %cst_9 = arith.constant 5.96046448E-8 : f32
    %52 = vector.broadcast %cst_9 : f32 to vector<4x128xf32>
    %53 = arith.mulf %51, %52 : vector<4x128xf32>
    %54 = math.log %48 : vector<4x128xf32>
    %cst_10 = arith.constant -2.000000e+00 : f32
    %55 = vector.broadcast %cst_10 : f32 to vector<4x128xf32>
    %56 = arith.mulf %55, %54 : vector<4x128xf32>
    %57 = math.sqrt %56 : vector<4x128xf32>
    %cst_11 = arith.constant 6.28318548 : f32
    %58 = vector.broadcast %cst_11 : f32 to vector<4x128xf32>
    %59 = arith.mulf %58, %53 : vector<4x128xf32>
    %60 = math.cos %59 : vector<4x128xf32>
    %61 = arith.mulf %57, %60 : vector<4x128xf32>
    %62 = math.sin %59 : vector<4x128xf32>
    %63 = arith.mulf %57, %62 : vector<4x128xf32>
    %64 = tpu.concatenate %61, %63 in 1 : vector<4x128xf32>, vector<4x128xf32> -> vector<4x256xf32>
    %c0_12 = arith.constant 0 : index
    %c0_13 = arith.constant 0 : index
    %c0_14 = arith.constant 0 : index
    %65 = vector.load %arg3[%c0_12, %c0_13, %c0_14] : memref<1x4x256xf32, #tpu.memory_space<vmem>>, vector<1x4x256xf32>
    %66 = vector.shape_cast %65 : vector<1x4x256xf32> to vector<4x256xf32>
    %c0_15 = arith.constant 0 : index
    %c0_16 = arith.constant 0 : index
    %c0_17 = arith.constant 0 : index
    %67 = vector.load %arg4[%c0_15, %c0_16, %c0_17] : memref<1x4x1xf32, #tpu.memory_space<vmem>>, vector<1x4x1xf32>
    %68 = vector.shape_cast %67 : vector<1x4x1xf32> to vector<4x1xf32>
    %69 = vector.broadcast %68 : vector<4x1xf32> to vector<4x256xf32>
    %70 = arith.mulf %64, %69 : vector<4x256xf32>
    %71 = arith.addf %66, %70 : vector<4x256xf32>
    %c0_18 = arith.constant 0 : index
    %c0_19 = arith.constant 0 : index
    %c0_20 = arith.constant 0 : index
    %72 = vector.load %arg5[%c0_18, %c0_19, %c0_20] : memref<1x4x256xf32, #tpu.memory_space<vmem>>, vector<1x4x256xf32>
    %73 = vector.shape_cast %72 : vector<1x4x256xf32> to vector<4x256xf32>
    %74 = vector.shape_cast %71 : vector<4x256xf32> to vector<1x4x256xf32>
    tpu.vector_store %arg5[%c0_18, %c0_19, %c0_20], %74 {strides = array<i32>} : memref<1x4x256xf32, #tpu.memory_space<vmem>>, vector<1x4x256xf32>,
    return
  }
  func.func @transform_0(%arg0: i32, %arg1: i32, %arg2: memref<1xi32, #tpu.memory_space<smem>>) -> (i32, i32, i32) {
    %c0_i32 = arith.constant 0 : i32
    %c0_i32_0 = arith.constant 0 : i32
    return %arg0, %c0_i32, %arg1 : i32, i32, i32
  }
  func.func @transform_1(%arg0: i32, %arg1: i32, %arg2: memref<1xi32, #tpu.memory_space<smem>>) -> (i32, i32, i32) {
    %c0_i32 = arith.constant 0 : i32
    %c0_i32_0 = arith.constant 0 : i32
    %c0_i32_1 = arith.constant 0 : i32
    return %arg0, %c0_i32, %c0_i32_0 : i32, i32, i32
  }
  func.func @transform_2(%arg0: i32, %arg1: i32, %arg2: memref<1xi32, #tpu.memory_space<smem>>) -> (i32, i32, i32) {
    %c0_i32 = arith.constant 0 : i32
    %c0_i32_0 = arith.constant 0 : i32
    return %arg0, %c0_i32, %arg1 : i32, i32, i32
  }
}

</mosaic_0001>

<llo_original>
// kernel: tpu_custom_call.1
$region0: #{tpu_custom_call.1}
  #allocation0 [shape = 'u32[]', space=smem, size = 0x4, offset = 0x4, fixed_abs, tag = 'smem constant byte address 0x4 - core index']
  #allocation1 [shape = 'u32[144,128]{1,0:T(1,128)}', space=vmem, size = 0x12000, scoped, tag = 'internal scratch']
  #allocation2 [shape = 's32[1]{0}', space=sflag, size = 0x4, scoped, tag = 'scoped memory for tpu_custom_call.1']
  #allocation3 [shape = 's32[1]{0:T(128)S(6)}', space=smem, size = 0x200, scoped, tag = 'prefetched SMEM operand 0']
  %s0 = inlined_call_operand.<no memory space> [shape: s32[1], index: 0, kind: input, shape index: {}]
  %s1 = inlined_call_operand.hbm [shape: f32[2,4,256], index: 1, kind: input, shape index: {}]
  %s2 = inlined_call_operand.vmem [shape: f32[2,4,1], index: 2, kind: input, shape index: {}]
  %s3 = inlined_call_operand.hbm [shape: f32[2,4,256], index: 3, kind: output, shape index: {}]
  %s4 = sld [smem:[#allocation0]]
  $region45: #{tpu_custom_call.1} parent=0
    _
  %s6 = ssub.s32 1, %s4
  %s7 = scalar_select 0, %s6, %s4
  %8 = sst [smem:[#allocation3]] %s0
  $region1: #{tpu_custom_call.1} parent=0
    #allocation4 [shape = 'u8[8192]{0}', space=vmem, size = 0x2000, scoped, tag = 'input window, operand 1']
    #allocation5 [shape = 's32[2]{0}', space=sflag, size = 0x8, scoped, tag = 'scoped memory for tpu_custom_call.1']
    #allocation6 [shape = 's32[2]{0}', space=sflag, size = 0x8, scoped, tag = 'scoped memory for tpu_custom_call.1']
    #allocation7 [shape = 'u8[8192]{0}', space=vmem, size = 0x2000, scoped, tag = 'output window, operand 0']
    %9 = vsyncpa [#allocation5], 0
    %s10 = scalar_lea.sflag [#allocation5], 1
    %11 = vsyncpa %s10, 0
    %12 = vsyncpa [#allocation6], 0
    %s13 = scalar_lea.sflag [#allocation6], 1
    %14 = vsyncpa %s13, 0
    loop: start=0, step=1, limit=4
    $region2: #{tpu_custom_call.1} parent=1 // loop_pre_header
      _
    $region3: #{tpu_custom_call.1} parent=1 // loop_header
      %s16 = sphi 0, %s20
      %p17 = scmp.ge.s32.totalorder %s16, 4
      %s23 = sphi 0, %s35
      %s24 = sphi 0, %s31
      %s25 = sphi 0, %s23
      %s26 = sphi 0, %s24
      %s27 = sphi 0, %s25
      %s28 = sphi 0, %s26
      %s40 = sphi 0, %s42
      %s43 = sphi 0, %s40
      %s44 = sphi 0, %s43
      %s60 = sphi 0, %s44
      %s66 = sphi 0, %s68
      %s69 = sphi 0, %s66
      %s70 = sphi 0, %s69
      %s86 = sphi 0, %s70
      %s94 = sphi 0, %s96
      %s97 = sphi 0, %s94
      %s98 = sphi 0, %s97
      %s114 = sphi 0, %s98
    $region4: #{tpu_custom_call.1} parent=1 // loop_header_branch
      %19 = sbr.rel (%p17) target = $region8
    $region5: #{tpu_custom_call.1} parent=1 // loop_body
      %s21 = ssub.s32 %s16, 1
      %s22 = ssub.s32 %s16, 2
      %s29 = sadd.s32 1, %s24
      %p30 = scmp.ge.s32.totalorder %s29, 1
      %s31 = scalar_select %p30, 0, %s29
      %s32 = sadd.s32 1, %s23
      %s33 = scalar_select %p30, %s32, %s23
      %p34 = scmp.ge.s32.totalorder %s33, 2
      %s35 = scalar_select %p34, 0, %s33
      %s36 = ssub.s32 %s23, %s35
      %s37 = ssub.s32 %s24, %s31
      %s38 = sor.u32 %s36, %s37
      %p39 = scmp.eq.s32.totalorder %s38, 0
      %s41 = sadd.s32 %s40, 1
      %s42 = scalar_select %p39, %s40, %s41
      %p45 = pneg %p39
      %p46 = scmp.eq.s32.totalorder %s16, 1
      %p47 = por %p45, %p46
      %p48 = scmp.ne.s32.totalorder %s40, %s43
      %p49 = scmp.eq.s32.totalorder %s16, 0
      %p50 = por %p48, %p49
      %p51 = scmp.ne.s32.totalorder %s40, %s43
      %p52 = scmp.eq.s32.totalorder %s21, 1
      %p53 = por %p51, %p52
      %p54 = scmp.ne.s32.totalorder %s43, %s44
      %p55 = scmp.eq.s32.totalorder %s21, 0
      %p56 = por %p54, %p55
      %p57 = scmp.ne.s32.totalorder %s43, %s44
      %p58 = scmp.eq.s32.totalorder %s22, 1
      %p59 = por %p57, %p58
      %p61 = scmp.ne.s32.totalorder %s44, %s60
      %p62 = scmp.eq.s32.totalorder %s22, 0
      %p63 = por %p61, %p62
      %s64 = ssub.s32 %s23, %s35
      %p65 = scmp.eq.s32.totalorder %s64, 0
      %s67 = sadd.s32 %s66, 1
      %s68 = scalar_select %p65, %s66, %s67
      %p71 = pneg %p65
      %p72 = scmp.eq.s32.totalorder %s16, 1
      %p73 = por %p71, %p72
      %p74 = scmp.ne.s32.totalorder %s66, %s69
      %p75 = scmp.eq.s32.totalorder %s16, 0
      %p76 = por %p74, %p75
      %p77 = scmp.ne.s32.totalorder %s66, %s69
      %p78 = scmp.eq.s32.totalorder %s21, 1
      %p79 = por %p77, %p78
      %p80 = scmp.ne.s32.totalorder %s69, %s70
      %p81 = scmp.eq.s32.totalorder %s21, 0
      %p82 = por %p80, %p81
      %p83 = scmp.ne.s32.totalorder %s69, %s70
      %p84 = scmp.eq.s32.totalorder %s22, 1
      %p85 = por %p83, %p84
      %p87 = scmp.ne.s32.totalorder %s70, %s86
      %p88 = scmp.eq.s32.totalorder %s22, 0
      %p89 = por %p87, %p88
      %s90 = ssub.s32 %s23, %s35
      %s91 = ssub.s32 %s24, %s31
      %s92 = sor.u32 %s90, %s91
      %p93 = scmp.eq.s32.totalorder %s92, 0
      %s95 = sadd.s32 %s94, 1
      %s96 = scalar_select %p93, %s94, %s95
      %p99 = pneg %p93
      %p100 = scmp.eq.s32.totalorder %s16, 1
      %p101 = por %p99, %p100
      %p102 = scmp.ne.s32.totalorder %s94, %s97
      %p103 = scmp.eq.s32.totalorder %s16, 0
      %p104 = por %p102, %p103
      %p105 = scmp.ne.s32.totalorder %s94, %s97
      %p106 = scmp.eq.s32.totalorder %s21, 1
      %p107 = por %p105, %p106
      %p108 = scmp.ne.s32.totalorder %s97, %s98
      %p109 = scmp.eq.s32.totalorder %s21, 0
      %p110 = por %p108, %p109
      %p111 = scmp.ne.s32.totalorder %s97, %s98
      %p112 = scmp.eq.s32.totalorder %s22, 1
      %p113 = por %p111, %p112
      %p115 = scmp.ne.s32.totalorder %s98, %s114
      %p116 = scmp.eq.s32.totalorder %s22, 0
      %p117 = por %p115, %p116
      %p118 = scmp.le.s32.totalorder 1, %s16
      %p119 = scmp.lt.s32.totalorder %s16, 3
      %p120 = pnand %p118, %p119
      %p121 = pneg %p120
      // Predicated region
      $region9: #{tpu_custom_call.1} parent=5 // pred_check
        _
      $region10: #{tpu_custom_call.1} parent=5 // pred_check_branch
        %123 = sbr.rel (%p120) target = $region12
      $region11: #{tpu_custom_call.1} parent=5 // pred_region
        %s124 = ssub.s32 %s16, 1
      $region12: #{tpu_custom_call.1} parent=5 // pred_fallthru
        _
      %p125 = scmp.lt.s32.totalorder %s16, 2
      // Predicated region
      $region13: #{tpu_custom_call.1} parent=5 // pred_check
        %p126 = pneg %p125
      $region14: #{tpu_custom_call.1} parent=5 // pred_check_branch
        %128 = sbr.rel (%p126) target = $region16
      $region15: #{tpu_custom_call.1} parent=5 // pred_region
        // Predicated region
        $region17: #{tpu_custom_call.1} parent=15 // pred_check
          %p129 = pneg %p50
        $region18: #{tpu_custom_call.1} parent=15 // pred_check_branch
          %131 = sbr.rel (%p129) target = $region20
        $region19: #{tpu_custom_call.1} parent=15 // pred_region
          %s132 = sand.u32 %s40, 1
          %s133 = scalar_lea.sflag [#allocation5], %s132
          %s134 = sand.u32 %s40, 1
          %s135 = smul.addr %s134, 8
          %s136 = scalar_lea.vmem [#allocation4], %s135
          %s137 = smul.u32 2, %s24
          %s139 = ssub.s32 128, 128
          %140 = vsyncadd %s133, %s139
          %s141 = smul.addr %s23, 2
          %s142 = sadd.s32 %s137, %s141
          %s143 = smul.addr %s142, 64
          %s144 = scalar_lea.hbm %s1, %s143
          %s146 = sshll.u32 %s136, 4
          %s147 = int_to_ptr.vmem [resolvable:$true] %s146
          %149 = dma.hbm_to_vmem [thread:$0]  %s144, 128, %s147, %s133
        $region20: #{tpu_custom_call.1} parent=15 // pred_fallthru
          _
        // Predicated region
        $region21: #{tpu_custom_call.1} parent=15 // pred_check
          %p150 = pneg %p76
        $region22: #{tpu_custom_call.1} parent=15 // pred_check_branch
          %152 = sbr.rel (%p150) target = $region24
        $region23: #{tpu_custom_call.1} parent=15 // pred_region
          %p153 = scmp.lt.s32.totalorder %s23, 1
          %s154 = scalar_select %p153, %s23, 1
          %s155 = smul.addr %s154, 4
          %s156 = scalar_lea.vmem %s2, %s155
        $region24: #{tpu_custom_call.1} parent=15 // pred_fallthru
          _
      $region16: #{tpu_custom_call.1} parent=5 // pred_fallthru
        _
      %p157 = scmp.le.s32.totalorder 1, %s16
      %p158 = scmp.lt.s32.totalorder %s16, 3
      %p159 = pnand %p157, %p158
      %p160 = pneg %p159
      // Predicated region
      $region25: #{tpu_custom_call.1} parent=5 // pred_check
        _
      $region26: #{tpu_custom_call.1} parent=5 // pred_check_branch
        %162 = sbr.rel (%p159) target = $region28
      $region27: #{tpu_custom_call.1} parent=5 // pred_region
        %s163 = ssub.s32 %s16, 1
        %s164 = sand.u32 %s43, 1
        %s165 = scalar_lea.sflag [#allocation5], %s164
        %s166 = sand.u32 %s43, 1
        %s167 = smul.addr %s166, 8
        %s168 = scalar_lea.vmem [#allocation4], %s167
        // Predicated region
        $region29: #{tpu_custom_call.1} parent=27 // pred_check
          %p169 = pneg %p56
        $region30: #{tpu_custom_call.1} parent=27 // pred_check_branch
          %171 = sbr.rel (%p169) target = $region32
        $region31: #{tpu_custom_call.1} parent=27 // pred_region
          %172 = dma.done %s165, 128
        $region32: #{tpu_custom_call.1} parent=27 // pred_fallthru
          _
        %s173 = sand.u32 %s43, 1
        %s174 = scalar_lea.sflag [#allocation5], %s173
        %s175 = sand.u32 %s43, 1
        %s176 = smul.addr %s175, 8
        %s177 = scalar_lea.vmem [#allocation4], %s176
        %p178 = pneg %p56
        %p179 = pneg %p53
        %p180 = scmp.lt.s32.totalorder %s25, 1
        %s181 = scalar_select %p180, %s25, 1
        %s182 = smul.addr %s181, 4
        %s183 = scalar_lea.vmem %s2, %s182
        %p184 = pneg %p82
        %p185 = pneg %p79
        %p186 = pneg %p110
        %p187 = pneg %p107
        %s188 = sand.u32 %s97, 1
        %s189 = scalar_lea.sflag [#allocation6], %s188
        %s190 = sand.u32 %s97, 1
        %s191 = smul.addr %s190, 8
        %s192 = scalar_lea.vmem [#allocation7], %s191
        %s193 = smul.u32 2, %s26
        %p194 = scmp.lt.s32.totalorder %s25, 1
        %s195 = scalar_select %p194, %s25, 1
        %s196 = smul.addr %s195, 4
        %s197 = scalar_lea.vmem %s2, %s196
        %s198 = smul.u32 2, %s26
        %v199 = vlaneseq
        %v200 = vshrl.u32 %v199, 7
        %v201 = vlaneseq
        %v202 = vand.u32 %v201, 127
        %s203 = smul.u32 %s25, 4
        %v204 = vstv %s203
        %v205 = vadd.s32 %v204, %v200
        %v206 = vmul.u32 %v205, 256
        %s207 = smul.u32 %s26, 256
        %v208 = vstv %s207
        %v209 = vadd.s32 %v206, %v208
        %v210 = vadd.s32 %v209, %v202
        %s211 = sld [smem:[#allocation3]]
        %v212 = vstv %s211
        %v213 = vxor.u32 %v210, %v212
        %v214 = vshrl.u32 %v213, 16
        %v215 = vxor.u32 %v213, %v214
        %v216 = vmul.u32 %v215, 2146121005
        %v217 = vshrl.u32 %v216, 15
        %v218 = vxor.u32 %v216, %v217
        %v219 = vmul.u32 %v218, 2221713035
        %v220 = vshrl.u32 %v219, 16
        %v221 = vxor.u32 %v219, %v220
        %v222 = vxor.u32 %v213, 2654435769
        %v223 = vshrl.u32 %v222, 16
        %v224 = vxor.u32 %v222, %v223
        %v225 = vmul.u32 %v224, 2146121005
        %v226 = vshrl.u32 %v225, 15
        %v227 = vxor.u32 %v225, %v226
        %v228 = vmul.u32 %v227, 2221713035
        %v229 = vshrl.u32 %v228, 16
        %v230 = vxor.u32 %v228, %v229
        %v231 = vshrl.u32 %v221, 8
        %v232 = vcvt.s32.f32 %v231
        %v233 = vadd.f32 %v232, 1.0
        %v234 = vmul.f32 %v233, 5.9604645e-08
        %v235 = vshrl.u32 %v230, 8
        %v236 = vcvt.s32.f32 %v235
        %v237 = vmul.f32 %v236, 5.9604645e-08
        %v238 = vlog2.pop %v234
        %v239 = vmul.f32 %v238, 0.6931472
        %v240 = vmul.f32 %v239, -2.0
        %v241 = vrsqrt.pop %v240
        %v242 = vmul.f32 %v240, %v241
        %vm243 = vcmp.eq.f32.partialorder %v240, inf
        %v244 = vsel %vm243, %v240, %v242
        %vm245 = vcmp.eq.f32.partialorder %v240, 0.0
        %v246 = vand.u32 %v240, 2147483648
        %v247 = vsel %vm245, %v246, %v244
        %v248 = vmul.f32 %v237, 6.2831855
        %v249 = vand.u32 2147483647, %v248
        %vm250 = vcmp.le.f32.partialorder %v249, 0.7853982
        %vm251 = vcmp.lt.s32.totalorder %v248, 0
        %v252 = vand.u32 %v248, 2139095040
        %v253 = vshrl.u32 %v252, 23
        %v254 = vsub.s32 %v253, 127
        %v255 = vand.u32 2147483647, %v248
        %v256 = vand.u32 %v255, 8388607
        %v257 = vor.u32 %v256, 8388608
        %v258 = vsub.s32 0, %v257
        %v259 = vadd.s32 %v254, 1
        %vm260 = vcmp.gt.s32.totalorder %v259, 0
        %v261 = vsel %vm260, %v259, 0
        %v262 = vshrl.u32 %v261, 5
        %v263 = vand.u32 %v261, 31
        %v264 = vsub.s32 32, %v263
        %v265 = vshrl.u32 683565275, %v264
        %v266 = vshll.u32 683565275, %v263
        %v267 = vshrl.u32 2475754826, %v264
        %v268 = vor.u32 %v266, %v267
        %v269 = vshll.u32 2475754826, %v263
        %v270 = vshrl.u32 2131351028, %v264
        %v271 = vor.u32 %v269, %v270
        %v272 = vshll.u32 2131351028, %v263
        %v273 = vshrl.u32 2102212464, %v264
        %v274 = vor.u32 %v272, %v273
        %v275 = vshll.u32 2102212464, %v263
        %v276 = vshrl.u32 920167782, %v264
        %v277 = vor.u32 %v275, %v276
        %v278 = vshll.u32 920167782, %v263
        %v279 = vshrl.u32 1326507024, %v264
        %v280 = vor.u32 %v278, %v279
        %vm281 = vcmp.lt.s32.totalorder %v262, 1
        %vm282 = vcmp.lt.s32.totalorder %v262, 2
        %vm283 = vcmp.lt.s32.totalorder %v262, 3
        %vm284 = vcmp.lt.s32.totalorder %v262, 4
        %v285 = vsel %vm281, %v265, %v268
        %v286 = vsel %vm284, %v274, 2102212464
        %v287 = vsel %vm283, %v271, %v286
        %v288 = vsel %vm282, %v285, %v287
        %v289 = vsel %vm281, %v268, %v271
        %v290 = vsel %vm284, %v277, 920167782
        %v291 = vsel %vm283, %v274, %v290
        %v292 = vsel %vm282, %v289, %v291
        %v293 = vsel %vm281, %v271, %v274
        %v294 = vsel %vm284, %v280, 1326507024
        %v295 = vsel %vm283, %v277, %v294
        %v296 = vsel %vm282, %v293, %v295
        %v297 = vshll.u32 %v257, 8
        %v298 = vmul.u32.u64.compose %v297, %v296
        %v299 = vextract.low.u32 %v298
        %v300 = vextract.high.u32 %v298
        %v301 = vmul.u32.u64.compose %v297, %v292
        %v302 = vextract.low.u32 %v301
        %v303 = vextract.high.u32 %v301
        %v304 = vmul.u32 %v297, %v288
        %v305 = vadd.s32 %v300, %v302
        %vm306 = vc.u32 %v300, %v302
        %v307 = vadd.s32 %v303, 1
        %v308 = vsel %vm306, %v307, %v303
        %v309 = vadd.s32 %v304, %v308
        %v310 = vadd.s32 %v309, 536870912
        %v311 = vshrl.u32 %v310, 30
        %v312 = vshll.u32 %v311, 30
        %v313 = vsub.s32 %v309, %v312
        %vm314 = vcmp.lt.s32.totalorder %v313, 0
        %v315 = vsub.s32 0, %v313
        %v316 = vsel %vm314, %v315, %v313
        %v317 = vclz %v316
        %v318 = vsub.s32 %v317, 2
        %vm319 = vcmp.gt.s32.totalorder 0, %v318
        %v320 = vsel %vm319, 0, %v318
        %v321 = vsub.s32 32, %v320
        %v322 = vshll.u32 %v313, %v320
        %v323 = vshrl.u32 %v305, %v321
        %v324 = vor.u32 %v322, %v323
        %v325 = vsub.s32 4294967266, %v320
        %v326 = vadd.s32 %v325, 127
        %v327 = vshll.u32 %v326, 23
        %v328 = vor.u32 4788187, %v327
        %v329 = vand.u32 2147483647, %v328
        %v331 = vcvt.s32.f32 %v324
        %v332 = vmul.f32 %v331, %v329
        %v333 = vxor.u32 %v332, 2147483648
        %v334 = vsel %vm251, %v333, %v332
        %v335 = vsub.s32 4, %v311
        %v336 = vsel %vm251, %v335, %v311
        %v337 = vsel %vm250, %v248, %v334
        %v338 = vsel %vm250, 0, %v336
        %v339 = vcosq.f32.pop %v337
        %v340 = vsinq.f32.pop %v337
        %vm341 = vweird.f32 %v248
        %v342 = vand.u32 %v338, 3
        %vm343 = vcmp.lt.s32.totalorder %v342, 2
        %vm344 = vcmp.eq.s32.totalorder %v342, 0
        %v345 = vxor.u32 %v340, 2147483648
        %v346 = vsel %vm344, %v339, %v345
        %vm347 = vcmp.eq.s32.totalorder %v342, 2
        %v348 = vxor.u32 %v339, 2147483648
        %v349 = vsel %vm347, %v348, %v340
        %v350 = vsel %vm343, %v346, %v349
        %v351 = vsel %vm341, nan, %v350
        %v352 = vmul.f32 %v247, %v351
        %v353 = vand.u32 2147483647, %v248
        %vm354 = vcmp.le.f32.partialorder %v353, 0.7853982
        %vm355 = vcmp.lt.s32.totalorder %v248, 0
        %v356 = vand.u32 %v248, 2139095040
        %v357 = vshrl.u32 %v356, 23
        %v358 = vsub.s32 %v357, 127
        %v359 = vand.u32 2147483647, %v248
        %v360 = vand.u32 %v359, 8388607
        %v361 = vor.u32 %v360, 8388608
        %v362 = vsub.s32 0, %v361
        %v363 = vadd.s32 %v358, 1
        %vm364 = vcmp.gt.s32.totalorder %v363, 0
        %v365 = vsel %vm364, %v363, 0
        %v366 = vshrl.u32 %v365, 5
        %v367 = vand.u32 %v365, 31
        %v368 = vsub.s32 32, %v367
        %v369 = vshrl.u32 683565275, %v368
        %v370 = vshll.u32 683565275, %v367
        %v371 = vshrl.u32 2475754826, %v368
        %v372 = vor.u32 %v370, %v371
        %v373 = vshll.u32 2475754826, %v367
        %v374 = vshrl.u32 2131351028, %v368
        %v375 = vor.u32 %v373, %v374
        %v376 = vshll.u32 2131351028, %v367
        %v377 = vshrl.u32 2102212464, %v368
        %v378 = vor.u32 %v376, %v377
        %v379 = vshll.u32 2102212464, %v367
        %v380 = vshrl.u32 920167782, %v368
        %v381 = vor.u32 %v379, %v380
        %v382 = vshll.u32 920167782, %v367
        %v383 = vshrl.u32 1326507024, %v368
        %v384 = vor.u32 %v382, %v383
        %vm385 = vcmp.lt.s32.totalorder %v366, 1
        %vm386 = vcmp.lt.s32.totalorder %v366, 2
        %vm387 = vcmp.lt.s32.totalorder %v366, 3
        %vm388 = vcmp.lt.s32.totalorder %v366, 4
        %v389 = vsel %vm385, %v369, %v372
        %v390 = vsel %vm388, %v378, 2102212464
        %v391 = vsel %vm387, %v375, %v390
        %v392 = vsel %vm386, %v389, %v391
        %v393 = vsel %vm385, %v372, %v375
        %v394 = vsel %vm388, %v381, 920167782
        %v395 = vsel %vm387, %v378, %v394
        %v396 = vsel %vm386, %v393, %v395
        %v397 = vsel %vm385, %v375, %v378
        %v398 = vsel %vm388, %v384, 1326507024
        %v399 = vsel %vm387, %v381, %v398
        %v400 = vsel %vm386, %v397, %v399
        %v401 = vshll.u32 %v361, 8
        %v402 = vmul.u32.u64.compose %v401, %v400
        %v403 = vextract.low.u32 %v402
        %v404 = vextract.high.u32 %v402
        %v405 = vmul.u32.u64.compose %v401, %v396
        %v406 = vextract.low.u32 %v405
        %v407 = vextract.high.u32 %v405
        %v408 = vmul.u32 %v401, %v392
        %v409 = vadd.s32 %v404, %v406
        %vm410 = vc.u32 %v404, %v406
        %v411 = vadd.s32 %v407, 1
        %v412 = vsel %vm410, %v411, %v407
        %v413 = vadd.s32 %v408, %v412
        %v414 = vadd.s32 %v413, 536870912
        %v415 = vshrl.u32 %v414, 30
        %v416 = vshll.u32 %v415, 30
        %v417 = vsub.s32 %v413, %v416
        %vm418 = vcmp.lt.s32.totalorder %v417, 0
        %v419 = vsub.s32 0, %v417
        %v420 = vsel %vm418, %v419, %v417
        %v421 = vclz %v420
        %v422 = vsub.s32 %v421, 2
        %vm423 = vcmp.gt.s32.totalorder 0, %v422
        %v424 = vsel %vm423, 0, %v422
        %v425 = vsub.s32 32, %v424
        %v426 = vshll.u32 %v417, %v424
        %v427 = vshrl.u32 %v409, %v425
        %v428 = vor.u32 %v426, %v427
        %v429 = vsub.s32 4294967266, %v424
        %v430 = vadd.s32 %v429, 127
        %v431 = vshll.u32 %v430, 23
        %v432 = vor.u32 4788187, %v431
        %v433 = vand.u32 2147483647, %v432
        %v435 = vcvt.s32.f32 %v428
        %v436 = vmul.f32 %v435, %v433
        %v437 = vxor.u32 %v436, 2147483648
        %v438 = vsel %vm355, %v437, %v436
        %v439 = vsub.s32 4, %v415
        %v440 = vsel %vm355, %v439, %v415
        %v441 = vsel %vm354, %v248, %v438
        %v442 = vsel %vm354, 0, %v440
        %v443 = vcosq.f32.pop %v441
        %v444 = vsinq.f32.pop %v441
        %vm445 = vweird.f32 %v248
        %v446 = vadd.s32 %v442, 3
        %v447 = vand.u32 %v446, 3
        %vm448 = vcmp.lt.s32.totalorder %v447, 2
        %vm449 = vcmp.eq.s32.totalorder %v447, 0
        %v450 = vxor.u32 %v444, 2147483648
        %v451 = vsel %vm449, %v443, %v450
        %vm452 = vcmp.eq.s32.totalorder %v447, 2
        %v453 = vxor.u32 %v443, 2147483648
        %v454 = vsel %vm452, %v453, %v444
        %v455 = vsel %vm448, %v451, %v454
        %v456 = vsel %vm445, nan, %v455
        %v457 = vmul.f32 %v247, %v456
        %v458 = vld [vmem:[%s168] sm:$0xff]
        %v459 = vld [vmem:[%s197] sm:$0xf]
        %461 = vset.pattern.permute.xlu0 0
        %462 = vperm.xlu0 %461, %v459
        %v463 = vpop.permute.xlu0 %462
        %v465 = vmul.f32 %v352, %v463
        %v466 = vmul.f32 %v457, %v463
        %v469 = vcombine.low %v465, %v466
        %v471 = vadd.f32 %v458, %v469
        %472 = vst [vmem:[%s192] sm:$0xff] %v471
        %s473 = sand.u32 %s97, 1
        %s474 = scalar_lea.sflag [#allocation6], %s473
        %s475 = sand.u32 %s97, 1
        %s476 = smul.addr %s475, 8
        %s477 = scalar_lea.vmem [#allocation7], %s476
        // Predicated region
        $region33: #{tpu_custom_call.1} parent=27 // pred_check
          %p478 = pneg %p107
        $region34: #{tpu_custom_call.1} parent=27 // pred_check_branch
          %480 = sbr.rel (%p478) target = $region36
        $region35: #{tpu_custom_call.1} parent=27 // pred_region
          %s481 = smul.u32 2, %s26
          %s483 = ssub.s32 128, 128
          %484 = vsyncadd %s474, %s483
          %s485 = smul.addr %s25, 2
          %s486 = sadd.s32 %s481, %s485
          %s487 = smul.addr %s486, 64
          %s488 = scalar_lea.hbm %s3, %s487
          %s490 = sshll.u32 %s477, 4
          %s491 = int_to_ptr.vmem [resolvable:$true] %s490
          %493 = dma.vmem_to_hbm [thread:$0]  %s491, 128, %s488, %s474
        $region36: #{tpu_custom_call.1} parent=27 // pred_fallthru
          _
      $region28: #{tpu_custom_call.1} parent=5 // pred_fallthru
        _
      %p494 = scmp.le.s32.totalorder 2, %s16
      // Predicated region
      $region37: #{tpu_custom_call.1} parent=5 // pred_check
        %p495 = pneg %p494
      $region38: #{tpu_custom_call.1} parent=5 // pred_check_branch
        %497 = sbr.rel (%p495) target = $region40
      $region39: #{tpu_custom_call.1} parent=5 // pred_region
        %s498 = ssub.s32 %s16, 2
        // Predicated region
        $region41: #{tpu_custom_call.1} parent=39 // pred_check
          %p499 = pneg %p113
        $region42: #{tpu_custom_call.1} parent=39 // pred_check_branch
          %501 = sbr.rel (%p499) target = $region44
        $region43: #{tpu_custom_call.1} parent=39 // pred_region
          %s502 = sand.u32 %s98, 1
          %s503 = scalar_lea.sflag [#allocation6], %s502
          %s504 = sand.u32 %s98, 1
          %s505 = smul.addr %s504, 8
          %s506 = scalar_lea.vmem [#allocation7], %s505
          %507 = dma.done %s503, 128
        $region44: #{tpu_custom_call.1} parent=39 // pred_fallthru
          _
      $region40: #{tpu_custom_call.1} parent=5 // pred_fallthru
        _
    $region6: #{tpu_custom_call.1} parent=1 // loop_footer
      %s20 = sadd.s32 1, %s16
    $region7: #{tpu_custom_call.1} parent=1 // loop_footer_branch
      %15 = sbr.rel target = $region3
    $region8: #{tpu_custom_call.1} parent=1 // loop_exit
      _
    %508 = vsyncpa [#allocation5], 1
    %s509 = scalar_lea.sflag [#allocation5], 1
    %510 = vsyncpa %s509, 1
    %511 = vsyncpa [#allocation6], 1
    %s512 = scalar_lea.sflag [#allocation6], 1
    %513 = vsyncpa %s512, 1

</llo_original>
